<compile_context>
chip_gen: v7x
topology: tpu7x:2x2x1
jax: 0.10.0
libtpu: 0.0.40
codegen_flags: <defaults>
</compile_context>

<pallas_src>
import jax
import jax.numpy as jnp
from jax.experimental import pallas as pl
from jax.experimental.pallas import tpu as pltpu


def _spatial_attention_kernel(w_ref, x_ref, o_ref):
    # w_ref: (2,) f32 in SMEM  -- [w_avg / C, w_max]  (1/C folded in)
    # x_ref: (1, C, T) block in VMEM (input dtype)
    # o_ref: (1, C, T) block in VMEM (input dtype)
    x = x_ref[...]                                                  # native dtype

    # channel statistics, accumulated in f32 (no full-tile f32 upcast)
    sum_c = jnp.sum(x, axis=1, keepdims=True, dtype=jnp.float32)    # (1, 1, T)
    max_c = jnp.max(x, axis=1, keepdims=True).astype(jnp.float32)   # (1, 1, T)

    # Conv2d(2, 1, (1,1), bias=False) on cat([mean, max]) == w0*mean + w1*max
    att = w_ref[0] * sum_c + w_ref[1] * max_c

    # act = LeakyReLU(0.1)
    att = jnp.where(att >= 0, att, 0.1 * att)
    # sigmoid: exp + reciprocal both on the EUP slot (approx rcp ~free here)
    att = pl.reciprocal(1.0 + jnp.exp(-att), approx=True)

    # broadcast gate over channels, in the input dtype
    o_ref[...] = att.astype(o_ref.dtype) * x


def spatial_attention(x, conv_weight, *, max_block_bytes=4 * 1024 * 1024):
    """x: (B, C, H, W); conv_weight: (1, 2, 1, 1) as in torch Conv2d(2,1,(1,1),bias=False)."""
    B, C, H, W = x.shape
    HW = H * W
    x2 = x.reshape(B, C, HW)                          # lane-dense spatial axis

    # Spatial tile: multiple of 128 sized to ~max_block_bytes per buffer, or
    # the full H*W extent when the image is small (full-extent is always legal).
    itemsize = jnp.dtype(x.dtype).itemsize
    t_hw = max(128, (max_block_bytes // (C * itemsize)) // 128 * 128)
    if HW <= t_hw:
        t_hw = HW
    n_s = pl.cdiv(HW, t_hw)

    # fold 1/C into the "mean" weight so the kernel does a plain channel sum
    w = conv_weight.reshape(2).astype(jnp.float32)
    w = w * jnp.array([1.0 / C, 1.0], dtype=jnp.float32)

    out = pl.pallas_call(
        _spatial_attention_kernel,
        out_shape=jax.ShapeDtypeStruct((B, C, HW), x.dtype),
        grid=(B, n_s),
        in_specs=[
            pl.BlockSpec(memory_space=pltpu.MemorySpace.SMEM),      # conv weights
            pl.BlockSpec((1, C, t_hw), lambda b, s: (b, 0, s)),     # input tile
        ],
        out_specs=pl.BlockSpec((1, C, t_hw), lambda b, s: (b, 0, s)),
        compiler_params=pltpu.CompilerParams(
            dimension_semantics=("parallel", "parallel"),
            vmem_limit_bytes=48 * 1024 * 1024,
        ),
    )(w, x2)
    return out.reshape(B, C, H, W)


def _reference(x, conv_weight):
    # pure-JAX reference mirroring the PyTorch forward
    xf = x.astype(jnp.float32)
    avg_out = jnp.mean(xf, axis=1, keepdims=True)
    max_out = jnp.max(xf, axis=1, keepdims=True)
    w = conv_weight.reshape(2).astype(jnp.float32)
    att = w[0] * avg_out + w[1] * max_out
    att = jnp.where(att >= 0, att, 0.1 * att)
    att = jax.nn.sigmoid(att)
    return (att * xf).astype(x.dtype)


if __name__ == "__main__":
    key = jax.random.PRNGKey(0)
    k_x, k_w = jax.random.split(key)

    B, C, H, W = 2, 4, 16, 16
    x = jax.random.normal(k_x, (B, C, H, W), dtype=jnp.float32)
    # Conv2d(2, 1, (1,1), bias=False) weight, deterministic init
    conv_weight = jax.random.normal(k_w, (1, 2, 1, 1), dtype=jnp.float32) * 0.5

    out = spatial_attention(x, conv_weight)
    out = jax.block_until_ready(out)

    ref = _reference(x, conv_weight)
    assert out.shape == (B, C, H, W)
    # tolerance loosened slightly for pl.reciprocal(approx=True)
    assert jnp.allclose(out, ref, atol=1e-2, rtol=1e-2), "mismatch vs reference"

    print("KERNEL_OK")
</pallas_src>

<mosaic_0001>
module attributes {stable_mosaic.version = 11 : i64} {
  func.func @_spatial_attention_kernel(%arg0: i32, %arg1: i32, %arg2: memref<2xf32, #tpu.memory_space<smem>>, %arg3: memref<1x4x256xf32, #tpu.memory_space<vmem>>, %arg4: memref<1x4x256xf32, #tpu.memory_space<vmem>>) attributes {dimension_semantics = [#tpu.dimension_semantics<parallel>, #tpu.dimension_semantics<parallel>], iteration_bounds = array<i64: 2, 1>, scalar_prefetch = 0 : i64, scratch_operands = 0 : i64, tpu.core_type = #tpu.core_type<tc>, window_params = [{transform_indices = @transform_0, window_bounds = array<i64: 2>}, {transform_indices = @transform_1, window_bounds = array<i64: 1, 4, 256>}, {transform_indices = @transform_2, window_bounds = array<i64: 1, 4, 256>}]} {
    %c0 = arith.constant 0 : index
    %c0_0 = arith.constant 0 : index
    %c0_1 = arith.constant 0 : index
    %0 = vector.load %arg3[%c0, %c0_0, %c0_1] : memref<1x4x256xf32, #tpu.memory_space<vmem>>, vector<1x4x256xf32>
    %cst = arith.constant dense<0.000000e+00> : vector<1x256xf32>
    %1 = vector.multi_reduction <add>, %0, %cst [1] : vector<1x4x256xf32> to vector<1x256xf32>
    %2 = vector.shape_cast %1 : vector<1x256xf32> to vector<1x1x256xf32>
    %cst_2 = arith.constant dense<0xFF800000> : vector<1x256xf32>
    %3 = vector.multi_reduction <maximumf>, %0, %cst_2 [1] : vector<1x4x256xf32> to vector<1x256xf32>
    %4 = vector.shape_cast %3 : vector<1x256xf32> to vector<1x1x256xf32>
    %c0_3 = arith.constant 0 : index
    %5 = memref.load %arg2[%c0_3] : memref<2xf32, #tpu.memory_space<smem>>
    %6 = vector.broadcast %5 : f32 to vector<1x1x256xf32>
    %7 = arith.mulf %6, %2 : vector<1x1x256xf32>
    %c1 = arith.constant 1 : index
    %8 = memref.load %arg2[%c1] : memref<2xf32, #tpu.memory_space<smem>>
    %9 = vector.broadcast %8 : f32 to vector<1x1x256xf32>
    %10 = arith.mulf %9, %4 : vector<1x1x256xf32>
    %11 = arith.addf %7, %10 : vector<1x1x256xf32>
    %cst_4 = arith.constant 0.000000e+00 : f32
    %12 = vector.broadcast %cst_4 : f32 to vector<1x1x256xf32>
    %13 = arith.cmpf oge, %11, %12 : vector<1x1x256xf32>
    %cst_5 = arith.constant 1.000000e-01 : f32
    %14 = vector.broadcast %cst_5 : f32 to vector<1x1x256xf32>
    %15 = arith.mulf %14, %11 : vector<1x1x256xf32>
    %16 = arith.select %13, %11, %15 : vector<1x1x256xi1>, vector<1x1x256xf32>
    %cst_6 = arith.constant 0.000000e+00 : f32
    %17 = vector.broadcast %cst_6 : f32 to vector<1x1x256xf32>
    %18 = arith.subf %17, %16 : vector<1x1x256xf32>
    %19 = math.exp %18 : vector<1x1x256xf32>
    %cst_7 = arith.constant 1.000000e+00 : f32
    %20 = vector.broadcast %cst_7 : f32 to vector<1x1x256xf32>
    %21 = arith.addf %20, %19 : vector<1x1x256xf32>
    %22 = tpu.reciprocal %21 {approx = true} : vector<1x1x256xf32> -> vector<1x1x256xf32>
    %23 = vector.broadcast %22 : vector<1x1x256xf32> to vector<1x4x256xf32>
    %24 = arith.mulf %23, %0 : vector<1x4x256xf32>
    %c0_8 = arith.constant 0 : index
    %c0_9 = arith.constant 0 : index
    %c0_10 = arith.constant 0 : index
    %25 = vector.load %arg4[%c0_8, %c0_9, %c0_10] : memref<1x4x256xf32, #tpu.memory_space<vmem>>, vector<1x4x256xf32>
    tpu.vector_store %arg4[%c0_8, %c0_9, %c0_10], %24 {strides = array<i32>} : memref<1x4x256xf32, #tpu.memory_space<vmem>>, vector<1x4x256xf32>,
    return
  }
  func.func @transform_0(%arg0: i32, %arg1: i32) -> i32 {
    %c0_i32 = arith.constant 0 : i32
    %c0_i32_0 = arith.constant 0 : i32
    return %c0_i32 : i32
  }
  func.func @transform_1(%arg0: i32, %arg1: i32) -> (i32, i32, i32) {
    %c0_i32 = arith.constant 0 : i32
    %c0_i32_0 = arith.constant 0 : i32
    return %arg0, %c0_i32, %arg1 : i32, i32, i32
  }
  func.func @transform_2(%arg0: i32, %arg1: i32) -> (i32, i32, i32) {
    %c0_i32 = arith.constant 0 : i32
    %c0_i32_0 = arith.constant 0 : i32
    return %arg0, %c0_i32, %arg1 : i32, i32, i32
  }
}

</mosaic_0001>

<llo_original>
// kernel: tpu_custom_call.1
$region0: #{tpu_custom_call.1}
  #allocation0 [shape = 'u32[]', space=smem, size = 0x4, offset = 0x4, fixed_abs, tag = 'smem constant byte address 0x4 - core index']
  #allocation1 [shape = 'u32[144,128]{1,0:T(1,128)}', space=vmem, size = 0x12000, scoped, tag = 'internal scratch']
  %s0 = inlined_call_operand.hbm [shape: f32[2], index: 0, kind: input, shape index: {}]
  %s1 = inlined_call_operand.hbm [shape: f32[2,4,256], index: 1, kind: input, shape index: {}]
  %s2 = inlined_call_operand.hbm [shape: f32[2,4,256], index: 2, kind: output, shape index: {}]
  %s3 = sld [smem:[#allocation0]]
  $region49: #{tpu_custom_call.1} parent=0
    _
  %s5 = ssub.s32 1, %s3
  %s6 = scalar_select 0, %s5, %s3
  $region1: #{tpu_custom_call.1} parent=0
    #allocation2 [shape = 'u8[512]{0}', space=smem, size = 0x200, scoped, tag = 'input window, operand 0, single buffered']
    #allocation3 [shape = 's32[2]{0}', space=sflag, size = 0x8, scoped, tag = 'scoped memory for tpu_custom_call.1']
    #allocation4 [shape = 's32[2]{0}', space=sflag, size = 0x8, scoped, tag = 'scoped memory for tpu_custom_call.1']
    #allocation5 [shape = 's32[2]{0}', space=sflag, size = 0x8, scoped, tag = 'scoped memory for tpu_custom_call.1']
    #allocation6 [shape = 'u8[8192]{0}', space=vmem, size = 0x2000, scoped, tag = 'input window, operand 1']
    #allocation7 [shape = 'u8[8192]{0}', space=vmem, size = 0x2000, scoped, tag = 'output window, operand 0']
    %7 = vsyncpa [#allocation5], 0
    %8 = vsyncpa [#allocation3], 0
    %s9 = scalar_lea.sflag [#allocation3], 1
    %10 = vsyncpa %s9, 0
    %11 = vsyncpa [#allocation4], 0
    %s12 = scalar_lea.sflag [#allocation4], 1
    %13 = vsyncpa %s12, 0
    loop: start=0, step=1, limit=4
    $region2: #{tpu_custom_call.1} parent=1 // loop_pre_header
      _
    $region3: #{tpu_custom_call.1} parent=1 // loop_header
      %s15 = sphi 0, %s19
      %p16 = scmp.ge.s32.totalorder %s15, 4
      %s22 = sphi 0, %s34
      %s23 = sphi 0, %s30
      %s24 = sphi 0, %s22
      %s25 = sphi 0, %s23
      %s26 = sphi 0, %s24
      %s27 = sphi 0, %s25
      %s35 = sphi 0, %s35
      %s37 = sphi 0, %s35
      %s38 = sphi 0, %s37
      %s52 = sphi 0, %s38
      %s60 = sphi 0, %s62
      %s63 = sphi 0, %s60
      %s64 = sphi 0, %s63
      %s80 = sphi 0, %s64
      %s88 = sphi 0, %s90
      %s91 = sphi 0, %s88
      %s92 = sphi 0, %s91
      %s108 = sphi 0, %s92
    $region4: #{tpu_custom_call.1} parent=1 // loop_header_branch
      %18 = sbr.rel (%p16) target = $region8
    $region5: #{tpu_custom_call.1} parent=1 // loop_body
      %s20 = ssub.s32 %s15, 1
      %s21 = ssub.s32 %s15, 2
      %s28 = sadd.s32 1, %s23
      %p29 = scmp.ge.s32.totalorder %s28, 1
      %s30 = scalar_select %p29, 0, %s28
      %s31 = sadd.s32 1, %s22
      %s32 = scalar_select %p29, %s31, %s22
      %p33 = scmp.ge.s32.totalorder %s32, 2
      %s34 = scalar_select %p33, 0, %s32
      %s36 = sadd.s32 %s35, 1
      %p39 = scmp.eq.s32.totalorder %s15, 1
      %p40 = scmp.ne.s32.totalorder %s35, %s37
      %p41 = scmp.eq.s32.totalorder %s15, 0
      %p42 = por %p40, %p41
      %p43 = scmp.ne.s32.totalorder %s35, %s37
      %p44 = scmp.eq.s32.totalorder %s20, 1
      %p45 = por %p43, %p44
      %p46 = scmp.ne.s32.totalorder %s37, %s38
      %p47 = scmp.eq.s32.totalorder %s20, 0
      %p48 = por %p46, %p47
      %p49 = scmp.ne.s32.totalorder %s37, %s38
      %p50 = scmp.eq.s32.totalorder %s21, 1
      %p51 = por %p49, %p50
      %p53 = scmp.ne.s32.totalorder %s38, %s52
      %p54 = scmp.eq.s32.totalorder %s21, 0
      %p55 = por %p53, %p54
      %s56 = ssub.s32 %s22, %s34
      %s57 = ssub.s32 %s23, %s30
      %s58 = sor.u32 %s56, %s57
      %p59 = scmp.eq.s32.totalorder %s58, 0
      %s61 = sadd.s32 %s60, 1
      %s62 = scalar_select %p59, %s60, %s61
      %p65 = pneg %p59
      %p66 = scmp.eq.s32.totalorder %s15, 1
      %p67 = por %p65, %p66
      %p68 = scmp.ne.s32.totalorder %s60, %s63
      %p69 = scmp.eq.s32.totalorder %s15, 0
      %p70 = por %p68, %p69
      %p71 = scmp.ne.s32.totalorder %s60, %s63
      %p72 = scmp.eq.s32.totalorder %s20, 1
      %p73 = por %p71, %p72
      %p74 = scmp.ne.s32.totalorder %s63, %s64
      %p75 = scmp.eq.s32.totalorder %s20, 0
      %p76 = por %p74, %p75
      %p77 = scmp.ne.s32.totalorder %s63, %s64
      %p78 = scmp.eq.s32.totalorder %s21, 1
      %p79 = por %p77, %p78
      %p81 = scmp.ne.s32.totalorder %s64, %s80
      %p82 = scmp.eq.s32.totalorder %s21, 0
      %p83 = por %p81, %p82
      %s84 = ssub.s32 %s22, %s34
      %s85 = ssub.s32 %s23, %s30
      %s86 = sor.u32 %s84, %s85
      %p87 = scmp.eq.s32.totalorder %s86, 0
      %s89 = sadd.s32 %s88, 1
      %s90 = scalar_select %p87, %s88, %s89
      %p93 = pneg %p87
      %p94 = scmp.eq.s32.totalorder %s15, 1
      %p95 = por %p93, %p94
      %p96 = scmp.ne.s32.totalorder %s88, %s91
      %p97 = scmp.eq.s32.totalorder %s15, 0
      %p98 = por %p96, %p97
      %p99 = scmp.ne.s32.totalorder %s88, %s91
      %p100 = scmp.eq.s32.totalorder %s20, 1
      %p101 = por %p99, %p100
      %p102 = scmp.ne.s32.totalorder %s91, %s92
      %p103 = scmp.eq.s32.totalorder %s20, 0
      %p104 = por %p102, %p103
      %p105 = scmp.ne.s32.totalorder %s91, %s92
      %p106 = scmp.eq.s32.totalorder %s21, 1
      %p107 = por %p105, %p106
      %p109 = scmp.ne.s32.totalorder %s92, %s108
      %p110 = scmp.eq.s32.totalorder %s21, 0
      %p111 = por %p109, %p110
      %p112 = scmp.le.s32.totalorder 1, %s15
      %p113 = scmp.lt.s32.totalorder %s15, 3
      %p114 = pnand %p112, %p113
      %p115 = pneg %p114
      // Predicated region
      $region9: #{tpu_custom_call.1} parent=5 // pred_check
        _
      $region10: #{tpu_custom_call.1} parent=5 // pred_check_branch
        %117 = sbr.rel (%p114) target = $region12
      $region11: #{tpu_custom_call.1} parent=5 // pred_region
        %s118 = ssub.s32 %s15, 1
        // Predicated region
        $region13: #{tpu_custom_call.1} parent=11 // pred_check
          %p119 = pneg %p48
        $region14: #{tpu_custom_call.1} parent=11 // pred_check_branch
          %121 = sbr.rel (%p119) target = $region16
        $region15: #{tpu_custom_call.1} parent=11 // pred_region
          %s123 = ssub.s32 16, 16
          %124 = vsyncadd [#allocation5], %s123
          %127 = dma.hbm_to_smem %s0, 16, [#allocation2], [#allocation5]
        $region16: #{tpu_custom_call.1} parent=11 // pred_fallthru
          _
      $region12: #{tpu_custom_call.1} parent=5 // pred_fallthru
        _
      %p128 = scmp.lt.s32.totalorder %s15, 2
      // Predicated region
      $region17: #{tpu_custom_call.1} parent=5 // pred_check
        %p129 = pneg %p128
      $region18: #{tpu_custom_call.1} parent=5 // pred_check_branch
        %131 = sbr.rel (%p129) target = $region20
      $region19: #{tpu_custom_call.1} parent=5 // pred_region
        // Predicated region
        $region21: #{tpu_custom_call.1} parent=19 // pred_check
          %p132 = pneg %p70
        $region22: #{tpu_custom_call.1} parent=19 // pred_check_branch
          %134 = sbr.rel (%p132) target = $region24
        $region23: #{tpu_custom_call.1} parent=19 // pred_region
          %s135 = sand.u32 %s60, 1
          %s136 = scalar_lea.sflag [#allocation3], %s135
          %s137 = sand.u32 %s60, 1
          %s138 = smul.addr %s137, 8
          %s139 = scalar_lea.vmem [#allocation6], %s138
          %s140 = smul.u32 2, %s23
          %s142 = ssub.s32 128, 128
          %143 = vsyncadd %s136, %s142
          %s144 = smul.addr %s22, 2
          %s145 = sadd.s32 %s140, %s144
          %s146 = smul.addr %s145, 64
          %s147 = scalar_lea.hbm %s1, %s146
          %s149 = sshll.u32 %s139, 4
          %s150 = int_to_ptr.vmem [resolvable:$true] %s149
          %152 = dma.hbm_to_vmem [thread:$0]  %s147, 128, %s150, %s136
        $region24: #{tpu_custom_call.1} parent=19 // pred_fallthru
          _
      $region20: #{tpu_custom_call.1} parent=5 // pred_fallthru
        _
      %p153 = scmp.le.s32.totalorder 1, %s15
      %p154 = scmp.lt.s32.totalorder %s15, 3
      %p155 = pnand %p153, %p154
      %p156 = pneg %p155
      // Predicated region
      $region25: #{tpu_custom_call.1} parent=5 // pred_check
        _
      $region26: #{tpu_custom_call.1} parent=5 // pred_check_branch
        %158 = sbr.rel (%p155) target = $region28
      $region27: #{tpu_custom_call.1} parent=5 // pred_region
        %s159 = ssub.s32 %s15, 1
        // Predicated region
        $region29: #{tpu_custom_call.1} parent=27 // pred_check
          %p160 = pneg %p48
        $region30: #{tpu_custom_call.1} parent=27 // pred_check_branch
          %162 = sbr.rel (%p160) target = $region32
        $region31: #{tpu_custom_call.1} parent=27 // pred_region
          %163 = dma.done [#allocation5], 16
        $region32: #{tpu_custom_call.1} parent=27 // pred_fallthru
          _
        %s164 = sand.u32 %s63, 1
        %s165 = scalar_lea.sflag [#allocation3], %s164
        %s166 = sand.u32 %s63, 1
        %s167 = smul.addr %s166, 8
        %s168 = scalar_lea.vmem [#allocation6], %s167
        // Predicated region
        $region33: #{tpu_custom_call.1} parent=27 // pred_check
          %p169 = pneg %p76
        $region34: #{tpu_custom_call.1} parent=27 // pred_check_branch
          %171 = sbr.rel (%p169) target = $region36
        $region35: #{tpu_custom_call.1} parent=27 // pred_region
          %172 = dma.done %s165, 128
        $region36: #{tpu_custom_call.1} parent=27 // pred_fallthru
          _
        %173 = sfence
        %p174 = pneg %p48
        %p175 = pneg %p45
        %s176 = sand.u32 %s63, 1
        %s177 = scalar_lea.sflag [#allocation3], %s176
        %s178 = sand.u32 %s63, 1
        %s179 = smul.addr %s178, 8
        %s180 = scalar_lea.vmem [#allocation6], %s179
        %p181 = pneg %p76
        %p182 = pneg %p73
        %p183 = pneg %p104
        %p184 = pneg %p101
        %s185 = sand.u32 %s91, 1
        %s186 = scalar_lea.sflag [#allocation4], %s185
        %s187 = sand.u32 %s91, 1
        %s188 = smul.addr %s187, 8
        %s189 = scalar_lea.vmem [#allocation7], %s188
        %s190 = smul.u32 2, %s25
        %s191 = smul.u32 2, %s25
        %v192 = vld [vmem:[%s168] sm:$0xff]
        %v194 = vcombine.high %v192, %v192
        %vm196 = vcmask 1043456
        %v197 = vsel %vm196, %v192, 0.0
        %v198 = vrot.slane %v197, 4
        %v199 = vadd.f32 %v197, %v198
        %v200 = vrot.slane %v199, 2
        %v201 = vadd.f32 %v199, %v200
        %v202 = vrot.slane %v201, 1
        %v203 = vadd.f32 %v201, %v202
        %v204 = vsel %vm196, %v194, 0.0
        %v205 = vrot.slane %v204, 4
        %v206 = vadd.f32 %v204, %v205
        %v207 = vrot.slane %v206, 2
        %v208 = vadd.f32 %v206, %v207
        %v209 = vrot.slane %v208, 1
        %v210 = vadd.f32 %v208, %v209
        %v211 = vsel %vm196, %v192, -inf
        %v212 = vrot.slane %v211, 4
        %v213 = vmax.f32 %v211, %v212
        %v214 = vrot.slane %v213, 2
        %v215 = vmax.f32 %v213, %v214
        %v216 = vrot.slane %v215, 1
        %v217 = vmax.f32 %v215, %v216
        %v218 = vsel %vm196, %v194, -inf
        %v219 = vrot.slane %v218, 4
        %v220 = vmax.f32 %v218, %v219
        %v221 = vrot.slane %v220, 2
        %v222 = vmax.f32 %v220, %v221
        %v223 = vrot.slane %v222, 1
        %v224 = vmax.f32 %v222, %v223
        %s225 = sld [smem:[#allocation2]]
        %v226 = vstv %s225
        %v227 = vmul.f32 %v226, %v203
        %v228 = vmul.f32 %v226, %v210
        %s229 = sld [smem:[#allocation2 + $0x1]]
        %v230 = vstv %s229
        %v231 = vmul.f32 %v230, %v217
        %v232 = vmul.f32 %v230, %v224
        %v233 = vadd.f32 %v227, %v231
        %v234 = vadd.f32 %v228, %v232
        %vm235 = vcmp.ge.f32.partialorder %v233, 0.0
        %vm236 = vcmp.ge.f32.partialorder %v234, 0.0
        %v237 = vmul.f32 %v233, 0.1
        %v238 = vmul.f32 %v234, 0.1
        %v239 = vsel %vm235, %v233, %v237
        %v240 = vsel %vm236, %v234, %v238
        %v241 = vsub.f32 0.0, %v239
        %v242 = vsub.f32 0.0, %v240
        %v243 = vmul.f32 %v241, 1.442695
        %v244 = vpow.pop %v243
        %v245 = vmul.f32 %v242, 1.442695
        %v246 = vpow.pop %v245
        %v247 = vadd.f32 %v244, 1.0
        %v248 = vadd.f32 %v246, 1.0
        %v249 = vrcp.pop %v247
        %v250 = vrcp.pop %v248
        %v251 = vmul.f32 %v249, %v192
        %v252 = vmul.f32 %v250, %v194
        %v255 = vcombine.low %v251, %v252
        %257 = vst [vmem:[%s189] sm:$0xff] %v255
        %s258 = sand.u32 %s91, 1
        %s259 = scalar_lea.sflag [#allocation4], %s258
        %s260 = sand.u32 %s91, 1
        %s261 = smul.addr %s260, 8
        %s262 = scalar_lea.vmem [#allocation7], %s261
        // Predicated region
        $region37: #{tpu_custom_call.1} parent=27 // pred_check
          %p263 = pneg %p101
        $region38: #{tpu_custom_call.1} parent=27 // pred_check_branch
          %265 = sbr.rel (%p263) target = $region40
        $region39: #{tpu_custom_call.1} parent=27 // pred_region
          %s266 = smul.u32 2, %s25
          %s268 = ssub.s32 128, 128
          %269 = vsyncadd %s259, %s268
          %s270 = smul.addr %s24, 2
          %s271 = sadd.s32 %s266, %s270
          %s272 = smul.addr %s271, 64
          %s273 = scalar_lea.hbm %s2, %s272
          %s275 = sshll.u32 %s262, 4
          %s276 = int_to_ptr.vmem [resolvable:$true] %s275
          %278 = dma.vmem_to_hbm [thread:$0]  %s276, 128, %s273, %s259
        $region40: #{tpu_custom_call.1} parent=27 // pred_fallthru
          _
      $region28: #{tpu_custom_call.1} parent=5 // pred_fallthru
        _
      %p279 = scmp.le.s32.totalorder 2, %s15
      // Predicated region
      $region41: #{tpu_custom_call.1} parent=5 // pred_check
        %p280 = pneg %p279
      $region42: #{tpu_custom_call.1} parent=5 // pred_check_branch
        %282 = sbr.rel (%p280) target = $region44
      $region43: #{tpu_custom_call.1} parent=5 // pred_region
        %s283 = ssub.s32 %s15, 2
        // Predicated region
        $region45: #{tpu_custom_call.1} parent=43 // pred_check
          %p284 = pneg %p107
        $region46: #{tpu_custom_call.1} parent=43 // pred_check_branch
          %286 = sbr.rel (%p284) target = $region48
        $region47: #{tpu_custom_call.1} parent=43 // pred_region
          %s287 = sand.u32 %s92, 1
          %s288 = scalar_lea.sflag [#allocation4], %s287
          %s289 = sand.u32 %s92, 1
          %s290 = smul.addr %s289, 8
          %s291 = scalar_lea.vmem [#allocation7], %s290
          %292 = dma.done %s288, 128
        $region48: #{tpu_custom_call.1} parent=43 // pred_fallthru
          _
      $region44: #{tpu_custom_call.1} parent=5 // pred_fallthru
        _
    $region6: #{tpu_custom_call.1} parent=1 // loop_footer
      %s19 = sadd.s32 1, %s15
    $region7: #{tpu_custom_call.1} parent=1 // loop_footer_branch
      %14 = sbr.rel target = $region3
    $region8: #{tpu_custom_call.1} parent=1 // loop_exit
      _
    %293 = vsyncpa [#allocation3], 1
    %s294 = scalar_lea.sflag [#allocation3], 1
    %295 = vsyncpa %s294, 1
    %296 = vsyncpa [#allocation4], 1
    %s297 = scalar_lea.sflag [#allocation4], 1
    %298 = vsyncpa %s297, 1
    %299 = vsyncpa [#allocation5], 1
    %s300 = scalar_lea.sflag [#allocation5], 1
    %301 = vsyncpa %s300, 1

</llo_original>
